<compile_context>
chip_gen: v6e
topology: v6e:2x2x1
jax: 0.10.0
libtpu: 0.0.40
codegen_flags: <defaults>
</compile_context>

<pallas_src>
import functools

import jax
import jax.numpy as jnp
import numpy as np
from jax.experimental import pallas as pl
from jax.experimental.pallas import tpu as pltpu


def prompt_block_kernel(x_ref, w00_ref, b00_ref, w01_ref, b01_ref,
                        w11_ref, b11_ref, o_ref, *, inp, hide, smooth_scale):
    # x_ref block: [B_blk, C, HW] with C = 2*inp (channels on sublanes, HW on lanes).

    # Hoist weights / biases once per grid step (tiny VMEM blocks, not SMEM
    # scalars) so no scalar->vreg splat happens inside the unrolled FMA loops.
    w00 = w00_ref[...].astype(jnp.float32)           # [hide, inp]
    w01 = w01_ref[...].astype(jnp.float32)           # [hide, inp]
    w11 = w11_ref[...].astype(jnp.float32)           # [inp, hide]
    b00 = b00_ref[...].astype(jnp.float32)           # [hide, 1]
    b01 = b01_ref[...].astype(jnp.float32)           # [hide, 1]
    b11 = b11_ref[...].astype(jnp.float32)           # [inp, 1]

    # conv0_0 / conv0_1: unrolled slab FMAs on the VPU over ALL hide channels.
    h0 = b00[None, :, :]                              # [1, hide, 1] -> broadcasts
    h1 = b01[None, :, :]
    for ic in range(inp):
        x0c = x_ref[:, ic:ic + 1, :].astype(jnp.float32)              # [B_blk,1,HW]
        x1c = x_ref[:, inp + ic:inp + ic + 1, :].astype(jnp.float32)  # [B_blk,1,HW]
        h0 = h0 + w00[None, :, ic:ic + 1] * x0c       # -> [B_blk, hide, HW]
        h1 = h1 + w01[None, :, ic:ic + 1] * x1c

    # Fovea: softmax over the spatial (lane) axis per (batch, hidden channel),
    # exactly matching softmax(dim=-1) on the PyTorch [B, C, H*W] view.
    s = h0 * smooth_scale if smooth_scale is not None else h0
    s = s - jnp.max(s, axis=-1, keepdims=True)
    e = jnp.exp(s)
    mask = e / jnp.sum(e, axis=-1, keepdims=True)     # exact divide (EUP has slack)
    f = mask * h0 + h1                                # fovea(x0) + x1, [B_blk,hide,HW]

    # conv1_1: all inp output channels as one slab; one dense store.
    y = b11[None, :, :]                               # [1, inp, 1] -> broadcasts
    for hc in range(hide):
        y = y + w11[None, :, hc:hc + 1] * f[:, hc:hc + 1, :]
    o_ref[...] = y.astype(o_ref.dtype)                # single [B_blk, inp, HW] store


def prompt_block(x_nchw, params, smooth=False, smooth_value=10.0, block_batch=None):
    """x_nchw: [B, C, W, H] like the PyTorch module; returns [B, C//2, W, H]."""
    B, C, W, H = x_nchw.shape
    inp = C // 2
    hide = params["b00"].shape[0]
    HW = W * H

    # NCHW -> [B, C, HW] is a free row-major reshape (no transpose, no copies).
    x = x_nchw.reshape(B, C, HW)

    # Pick the batch-block size: aim for ~1 MiB input blocks (amortize per-step
    # overhead, reach the HBM roofline), but keep >= 2 grid steps when B >= 2 so
    # v7x's two TensorCores both get work.
    if block_batch is None:
        bytes_per_b = C * HW * x.dtype.itemsize
        B_blk = max(1, min(B, (1 << 20) // max(bytes_per_b, 1)))
        if B >= 2:
            B_blk = min(B_blk, max(1, B // 2))
        while B % B_blk != 0:
            B_blk -= 1
    else:
        B_blk = block_batch
    grid = (B // B_blk,)

    kern = functools.partial(
        prompt_block_kernel, inp=inp, hide=hide,
        # TODO(synk): when smooth=True the PyTorch `smooth` is a learnable
        # nn.Parameter; pass its current value via `smooth_value` (init 10.0).
        smooth_scale=(float(smooth_value) if smooth else None))

    def full_spec(shape):
        return pl.BlockSpec(shape, lambda b: (0,) * len(shape))

    out = pl.pallas_call(
        kern,
        out_shape=jax.ShapeDtypeStruct((B, inp, HW), x_nchw.dtype),
        grid=grid,
        in_specs=[
            pl.BlockSpec((B_blk, C, HW), lambda b: (b, 0, 0)),  # x (both halves)
            full_spec((hide, inp)),   # w00
            full_spec((hide, 1)),     # b00
            full_spec((hide, inp)),   # w01
            full_spec((hide, 1)),     # b01
            full_spec((inp, hide)),   # w11
            full_spec((inp, 1)),      # b11
        ],
        out_specs=pl.BlockSpec((B_blk, inp, HW), lambda b: (b, 0, 0)),
        compiler_params=pltpu.CompilerParams(
            dimension_semantics=("parallel",)),
    )(x,
      params["w00"].astype(jnp.float32),
      params["b00"].reshape(hide, 1).astype(jnp.float32),
      params["w01"].astype(jnp.float32),
      params["b01"].reshape(hide, 1).astype(jnp.float32),
      params["w11"].astype(jnp.float32),
      params["b11"].reshape(inp, 1).astype(jnp.float32))

    # [B, inp, HW] -> [B, inp, W, H] is again a free reshape.
    return out.reshape(B, inp, W, H)


def _xavier_uniform(key, out_c, in_c):
    bound = float(np.sqrt(6.0 / (in_c + out_c)))
    return jax.random.uniform(key, (out_c, in_c), jnp.float32, -bound, bound)


def _conv_bias(key, in_c, out_c):
    bound = 1.0 / float(np.sqrt(in_c))
    return jax.random.uniform(key, (out_c,), jnp.float32, -bound, bound)


def init_params(key, inplanes, hide_channel):
    ks = jax.random.split(key, 6)
    return {
        "w00": _xavier_uniform(ks[0], hide_channel, inplanes),
        "b00": _conv_bias(ks[1], inplanes, hide_channel),
        "w01": _xavier_uniform(ks[2], hide_channel, inplanes),
        "b01": _conv_bias(ks[3], inplanes, hide_channel),
        "w11": _xavier_uniform(ks[4], inplanes, hide_channel),
        "b11": _conv_bias(ks[5], hide_channel, inplanes),
    }


def prompt_block_ref(x_nchw, params, smooth=False, smooth_value=10.0):
    """Pure-JAX reference mirroring the PyTorch forward."""
    B, C, W, H = x_nchw.shape
    inp = C // 2

    def conv1x1(x, w, b):  # x: [B, Cin, W, H], w: [Cout, Cin]
        y = jnp.einsum("bcwh,oc->bowh", x, w,
                       precision=jax.lax.Precision.HIGHEST)
        return y + b[None, :, None, None]

    x0 = conv1x1(x_nchw[:, :inp], params["w00"], params["b00"])
    x1 = conv1x1(x_nchw[:, inp:], params["w01"], params["b01"])
    b, c, w, h = x0.shape
    flat = x0.reshape(b, c, w * h)
    s = flat * smooth_value if smooth else flat
    mask = jax.nn.softmax(s, axis=-1)
    fov = (mask * flat).reshape(b, c, w, h)
    return conv1x1(fov + x1, params["w11"], params["b11"])


if __name__ == "__main__":
    key = jax.random.PRNGKey(0)
    kx, kp = jax.random.split(key)

    B, C, W, H = 2, 8, 16, 16          # inplanes = C // 2 = 4
    inplanes, hide_channel = C // 2, 4
    smooth = False

    x = jax.random.normal(kx, (B, C, W, H), dtype=jnp.float32)
    params = init_params(kp, inplanes, hide_channel)

    out = prompt_block(x, params, smooth=smooth)
    out = jax.block_until_ready(out)

    ref = prompt_block_ref(x, params, smooth=smooth)
    np.testing.assert_allclose(np.asarray(out), np.asarray(ref),
                               atol=1e-4, rtol=1e-4)
    assert out.shape == (B, inplanes, W, H)
    print("KERNEL_OK")
</pallas_src>

<mosaic_0001>
module attributes {stable_mosaic.version = 11 : i64} {
  func.func @prompt_block_kernel(%arg0: i32, %arg1: memref<1x8x256xf32, #tpu.memory_space<vmem>>, %arg2: memref<4x4xf32, #tpu.memory_space<vmem>>, %arg3: memref<4x1xf32, #tpu.memory_space<vmem>>, %arg4: memref<4x4xf32, #tpu.memory_space<vmem>>, %arg5: memref<4x1xf32, #tpu.memory_space<vmem>>, %arg6: memref<4x4xf32, #tpu.memory_space<vmem>>, %arg7: memref<4x1xf32, #tpu.memory_space<vmem>>, %arg8: memref<1x4x256xf32, #tpu.memory_space<vmem>>) attributes {dimension_semantics = [#tpu.dimension_semantics<parallel>], iteration_bounds = array<i64: 2>, scalar_prefetch = 0 : i64, scratch_operands = 0 : i64, tpu.core_type = #tpu.core_type<tc>, window_params = [{transform_indices = @transform_0, window_bounds = array<i64: 1, 8, 256>}, {pipeline_mode = #tpu.pipeline_mode<synchronous>, transform_indices = @transform_1, window_bounds = array<i64: 4, 4>}, {pipeline_mode = #tpu.pipeline_mode<synchronous>, transform_indices = @transform_2, window_bounds = array<i64: 4, 1>}, {pipeline_mode = #tpu.pipeline_mode<synchronous>, transform_indices = @transform_3, window_bounds = array<i64: 4, 4>}, {pipeline_mode = #tpu.pipeline_mode<synchronous>, transform_indices = @transform_4, window_bounds = array<i64: 4, 1>}, {pipeline_mode = #tpu.pipeline_mode<synchronous>, transform_indices = @transform_5, window_bounds = array<i64: 4, 4>}, {pipeline_mode = #tpu.pipeline_mode<synchronous>, transform_indices = @transform_6, window_bounds = array<i64: 4, 1>}, {transform_indices = @transform_7, window_bounds = array<i64: 1, 4, 256>}]} {
    %c0 = arith.constant 0 : index
    %c0_0 = arith.constant 0 : index
    %0 = vector.load %arg2[%c0, %c0_0] : memref<4x4xf32, #tpu.memory_space<vmem>>, vector<4x4xf32>
    %c0_1 = arith.constant 0 : index
    %c0_2 = arith.constant 0 : index
    %1 = vector.load %arg4[%c0_1, %c0_2] : memref<4x4xf32, #tpu.memory_space<vmem>>, vector<4x4xf32>
    %c0_3 = arith.constant 0 : index
    %c0_4 = arith.constant 0 : index
    %2 = vector.load %arg6[%c0_3, %c0_4] : memref<4x4xf32, #tpu.memory_space<vmem>>, vector<4x4xf32>
    %c0_5 = arith.constant 0 : index
    %c0_6 = arith.constant 0 : index
    %3 = vector.load %arg3[%c0_5, %c0_6] : memref<4x1xf32, #tpu.memory_space<vmem>>, vector<4x1xf32>
    %c0_7 = arith.constant 0 : index
    %c0_8 = arith.constant 0 : index
    %4 = vector.load %arg5[%c0_7, %c0_8] : memref<4x1xf32, #tpu.memory_space<vmem>>, vector<4x1xf32>
    %c0_9 = arith.constant 0 : index
    %c0_10 = arith.constant 0 : index
    %5 = vector.load %arg7[%c0_9, %c0_10] : memref<4x1xf32, #tpu.memory_space<vmem>>, vector<4x1xf32>
    %6 = vector.shape_cast %3 : vector<4x1xf32> to vector<1x4x1xf32>
    %7 = vector.shape_cast %4 : vector<4x1xf32> to vector<1x4x1xf32>
    %c0_11 = arith.constant 0 : index
    %c0_12 = arith.constant 0 : index
    %c0_13 = arith.constant 0 : index
    %8 = vector.load %arg1[%c0_11, %c0_12, %c0_13] : memref<1x8x256xf32, #tpu.memory_space<vmem>>, vector<1x1x256xf32>
    %c0_14 = arith.constant 0 : index
    %c4 = arith.constant 4 : index
    %c0_15 = arith.constant 0 : index
    %9 = vector.load %arg1[%c0_14, %c4, %c0_15] : memref<1x8x256xf32, #tpu.memory_space<vmem>>, vector<1x1x256xf32>
    %10 = vector.extract_strided_slice %0 {offsets = [0, 0], sizes = [4, 1], strides = [1, 1]} : vector<4x4xf32> to vector<4x1xf32>
    %11 = vector.shape_cast %10 : vector<4x1xf32> to vector<1x4x1xf32>
    %12 = vector.broadcast %11 : vector<1x4x1xf32> to vector<1x4x256xf32>
    %13 = vector.broadcast %8 : vector<1x1x256xf32> to vector<1x4x256xf32>
    %14 = arith.mulf %12, %13 : vector<1x4x256xf32>
    %15 = vector.broadcast %6 : vector<1x4x1xf32> to vector<1x4x256xf32>
    %16 = arith.addf %15, %14 : vector<1x4x256xf32>
    %17 = vector.extract_strided_slice %1 {offsets = [0, 0], sizes = [4, 1], strides = [1, 1]} : vector<4x4xf32> to vector<4x1xf32>
    %18 = vector.shape_cast %17 : vector<4x1xf32> to vector<1x4x1xf32>
    %19 = vector.broadcast %18 : vector<1x4x1xf32> to vector<1x4x256xf32>
    %20 = vector.broadcast %9 : vector<1x1x256xf32> to vector<1x4x256xf32>
    %21 = arith.mulf %19, %20 : vector<1x4x256xf32>
    %22 = vector.broadcast %7 : vector<1x4x1xf32> to vector<1x4x256xf32>
    %23 = arith.addf %22, %21 : vector<1x4x256xf32>
    %c0_16 = arith.constant 0 : index
    %c1 = arith.constant 1 : index
    %c0_17 = arith.constant 0 : index
    %24 = vector.load %arg1[%c0_16, %c1, %c0_17] : memref<1x8x256xf32, #tpu.memory_space<vmem>>, vector<1x1x256xf32>
    %c0_18 = arith.constant 0 : index
    %c5 = arith.constant 5 : index
    %c0_19 = arith.constant 0 : index
    %25 = vector.load %arg1[%c0_18, %c5, %c0_19] : memref<1x8x256xf32, #tpu.memory_space<vmem>>, vector<1x1x256xf32>
    %26 = vector.extract_strided_slice %0 {offsets = [0, 1], sizes = [4, 1], strides = [1, 1]} : vector<4x4xf32> to vector<4x1xf32>
    %27 = vector.shape_cast %26 : vector<4x1xf32> to vector<1x4x1xf32>
    %28 = vector.broadcast %27 : vector<1x4x1xf32> to vector<1x4x256xf32>
    %29 = vector.broadcast %24 : vector<1x1x256xf32> to vector<1x4x256xf32>
    %30 = arith.mulf %28, %29 : vector<1x4x256xf32>
    %31 = arith.addf %16, %30 : vector<1x4x256xf32>
    %32 = vector.extract_strided_slice %1 {offsets = [0, 1], sizes = [4, 1], strides = [1, 1]} : vector<4x4xf32> to vector<4x1xf32>
    %33 = vector.shape_cast %32 : vector<4x1xf32> to vector<1x4x1xf32>
    %34 = vector.broadcast %33 : vector<1x4x1xf32> to vector<1x4x256xf32>
    %35 = vector.broadcast %25 : vector<1x1x256xf32> to vector<1x4x256xf32>
    %36 = arith.mulf %34, %35 : vector<1x4x256xf32>
    %37 = arith.addf %23, %36 : vector<1x4x256xf32>
    %c0_20 = arith.constant 0 : index
    %c2 = arith.constant 2 : index
    %c0_21 = arith.constant 0 : index
    %38 = vector.load %arg1[%c0_20, %c2, %c0_21] : memref<1x8x256xf32, #tpu.memory_space<vmem>>, vector<1x1x256xf32>
    %c0_22 = arith.constant 0 : index
    %c6 = arith.constant 6 : index
    %c0_23 = arith.constant 0 : index
    %39 = vector.load %arg1[%c0_22, %c6, %c0_23] : memref<1x8x256xf32, #tpu.memory_space<vmem>>, vector<1x1x256xf32>
    %40 = vector.extract_strided_slice %0 {offsets = [0, 2], sizes = [4, 1], strides = [1, 1]} : vector<4x4xf32> to vector<4x1xf32>
    %41 = vector.shape_cast %40 : vector<4x1xf32> to vector<1x4x1xf32>
    %42 = vector.broadcast %41 : vector<1x4x1xf32> to vector<1x4x256xf32>
    %43 = vector.broadcast %38 : vector<1x1x256xf32> to vector<1x4x256xf32>
    %44 = arith.mulf %42, %43 : vector<1x4x256xf32>
    %45 = arith.addf %31, %44 : vector<1x4x256xf32>
    %46 = vector.extract_strided_slice %1 {offsets = [0, 2], sizes = [4, 1], strides = [1, 1]} : vector<4x4xf32> to vector<4x1xf32>
    %47 = vector.shape_cast %46 : vector<4x1xf32> to vector<1x4x1xf32>
    %48 = vector.broadcast %47 : vector<1x4x1xf32> to vector<1x4x256xf32>
    %49 = vector.broadcast %39 : vector<1x1x256xf32> to vector<1x4x256xf32>
    %50 = arith.mulf %48, %49 : vector<1x4x256xf32>
    %51 = arith.addf %37, %50 : vector<1x4x256xf32>
    %c0_24 = arith.constant 0 : index
    %c3 = arith.constant 3 : index
    %c0_25 = arith.constant 0 : index
    %52 = vector.load %arg1[%c0_24, %c3, %c0_25] : memref<1x8x256xf32, #tpu.memory_space<vmem>>, vector<1x1x256xf32>
    %c0_26 = arith.constant 0 : index
    %c7 = arith.constant 7 : index
    %c0_27 = arith.constant 0 : index
    %53 = vector.load %arg1[%c0_26, %c7, %c0_27] : memref<1x8x256xf32, #tpu.memory_space<vmem>>, vector<1x1x256xf32>
    %54 = vector.extract_strided_slice %0 {offsets = [0, 3], sizes = [4, 1], strides = [1, 1]} : vector<4x4xf32> to vector<4x1xf32>
    %55 = vector.shape_cast %54 : vector<4x1xf32> to vector<1x4x1xf32>
    %56 = vector.broadcast %55 : vector<1x4x1xf32> to vector<1x4x256xf32>
    %57 = vector.broadcast %52 : vector<1x1x256xf32> to vector<1x4x256xf32>
    %58 = arith.mulf %56, %57 : vector<1x4x256xf32>
    %59 = arith.addf %45, %58 : vector<1x4x256xf32>
    %60 = vector.extract_strided_slice %1 {offsets = [0, 3], sizes = [4, 1], strides = [1, 1]} : vector<4x4xf32> to vector<4x1xf32>
    %61 = vector.shape_cast %60 : vector<4x1xf32> to vector<1x4x1xf32>
    %62 = vector.broadcast %61 : vector<1x4x1xf32> to vector<1x4x256xf32>
    %63 = vector.broadcast %53 : vector<1x1x256xf32> to vector<1x4x256xf32>
    %64 = arith.mulf %62, %63 : vector<1x4x256xf32>
    %65 = arith.addf %51, %64 : vector<1x4x256xf32>
    %cst = arith.constant dense<0xFF800000> : vector<1x4xf32>
    %66 = vector.multi_reduction <maximumf>, %59, %cst [2] : vector<1x4x256xf32> to vector<1x4xf32>
    %67 = vector.shape_cast %66 : vector<1x4xf32> to vector<1x4x1xf32>
    %68 = vector.broadcast %67 : vector<1x4x1xf32> to vector<1x4x256xf32>
    %69 = arith.subf %59, %68 : vector<1x4x256xf32>
    %70 = math.exp %69 : vector<1x4x256xf32>
    %cst_28 = arith.constant dense<0.000000e+00> : vector<1x4xf32>
    %71 = vector.multi_reduction <add>, %70, %cst_28 [2] : vector<1x4x256xf32> to vector<1x4xf32>
    %72 = vector.shape_cast %71 : vector<1x4xf32> to vector<1x4x1xf32>
    %73 = vector.broadcast %72 : vector<1x4x1xf32> to vector<1x4x256xf32>
    %74 = arith.divf %70, %73 : vector<1x4x256xf32>
    %75 = arith.mulf %74, %59 : vector<1x4x256xf32>
    %76 = arith.addf %75, %65 : vector<1x4x256xf32>
    %77 = vector.shape_cast %5 : vector<4x1xf32> to vector<1x4x1xf32>
    %78 = vector.extract_strided_slice %2 {offsets = [0, 0], sizes = [4, 1], strides = [1, 1]} : vector<4x4xf32> to vector<4x1xf32>
    %79 = vector.shape_cast %78 : vector<4x1xf32> to vector<1x4x1xf32>
    %80 = vector.extract_strided_slice %76 {offsets = [0, 0, 0], sizes = [1, 1, 256], strides = [1, 1, 1]} : vector<1x4x256xf32> to vector<1x1x256xf32>
    %81 = vector.broadcast %79 : vector<1x4x1xf32> to vector<1x4x256xf32>
    %82 = vector.broadcast %80 : vector<1x1x256xf32> to vector<1x4x256xf32>
    %83 = arith.mulf %81, %82 : vector<1x4x256xf32>
    %84 = vector.broadcast %77 : vector<1x4x1xf32> to vector<1x4x256xf32>
    %85 = arith.addf %84, %83 : vector<1x4x256xf32>
    %86 = vector.extract_strided_slice %2 {offsets = [0, 1], sizes = [4, 1], strides = [1, 1]} : vector<4x4xf32> to vector<4x1xf32>
    %87 = vector.shape_cast %86 : vector<4x1xf32> to vector<1x4x1xf32>
    %88 = vector.extract_strided_slice %76 {offsets = [0, 1, 0], sizes = [1, 1, 256], strides = [1, 1, 1]} : vector<1x4x256xf32> to vector<1x1x256xf32>
    %89 = vector.broadcast %87 : vector<1x4x1xf32> to vector<1x4x256xf32>
    %90 = vector.broadcast %88 : vector<1x1x256xf32> to vector<1x4x256xf32>
    %91 = arith.mulf %89, %90 : vector<1x4x256xf32>
    %92 = arith.addf %85, %91 : vector<1x4x256xf32>
    %93 = vector.extract_strided_slice %2 {offsets = [0, 2], sizes = [4, 1], strides = [1, 1]} : vector<4x4xf32> to vector<4x1xf32>
    %94 = vector.shape_cast %93 : vector<4x1xf32> to vector<1x4x1xf32>
    %95 = vector.extract_strided_slice %76 {offsets = [0, 2, 0], sizes = [1, 1, 256], strides = [1, 1, 1]} : vector<1x4x256xf32> to vector<1x1x256xf32>
    %96 = vector.broadcast %94 : vector<1x4x1xf32> to vector<1x4x256xf32>
    %97 = vector.broadcast %95 : vector<1x1x256xf32> to vector<1x4x256xf32>
    %98 = arith.mulf %96, %97 : vector<1x4x256xf32>
    %99 = arith.addf %92, %98 : vector<1x4x256xf32>
    %100 = vector.extract_strided_slice %2 {offsets = [0, 3], sizes = [4, 1], strides = [1, 1]} : vector<4x4xf32> to vector<4x1xf32>
    %101 = vector.shape_cast %100 : vector<4x1xf32> to vector<1x4x1xf32>
    %102 = vector.extract_strided_slice %76 {offsets = [0, 3, 0], sizes = [1, 1, 256], strides = [1, 1, 1]} : vector<1x4x256xf32> to vector<1x1x256xf32>
    %103 = vector.broadcast %101 : vector<1x4x1xf32> to vector<1x4x256xf32>
    %104 = vector.broadcast %102 : vector<1x1x256xf32> to vector<1x4x256xf32>
    %105 = arith.mulf %103, %104 : vector<1x4x256xf32>
    %106 = arith.addf %99, %105 : vector<1x4x256xf32>
    %c0_29 = arith.constant 0 : index
    %c0_30 = arith.constant 0 : index
    %c0_31 = arith.constant 0 : index
    %107 = vector.load %arg8[%c0_29, %c0_30, %c0_31] : memref<1x4x256xf32, #tpu.memory_space<vmem>>, vector<1x4x256xf32>
    tpu.vector_store %arg8[%c0_29, %c0_30, %c0_31], %106 {strides = array<i32>} : memref<1x4x256xf32, #tpu.memory_space<vmem>>, vector<1x4x256xf32>,
    return
  }
  func.func @transform_0(%arg0: i32) -> (i32, i32, i32) {
    %c0_i32 = arith.constant 0 : i32
    %c0_i32_0 = arith.constant 0 : i32
    %c0_i32_1 = arith.constant 0 : i32
    return %arg0, %c0_i32, %c0_i32_0 : i32, i32, i32
  }
  func.func @transform_1(%arg0: i32) -> (i32, i32) {
    %c0_i32 = arith.constant 0 : i32
    %c0_i32_0 = arith.constant 0 : i32
    %c0_i32_1 = arith.constant 0 : i32
    return %c0_i32, %c0_i32_0 : i32, i32
  }
  func.func @transform_2(%arg0: i32) -> (i32, i32) {
    %c0_i32 = arith.constant 0 : i32
    %c0_i32_0 = arith.constant 0 : i32
    %c0_i32_1 = arith.constant 0 : i32
    return %c0_i32, %c0_i32_0 : i32, i32
  }
  func.func @transform_3(%arg0: i32) -> (i32, i32) {
    %c0_i32 = arith.constant 0 : i32
    %c0_i32_0 = arith.constant 0 : i32
    %c0_i32_1 = arith.constant 0 : i32
    return %c0_i32, %c0_i32_0 : i32, i32
  }
  func.func @transform_4(%arg0: i32) -> (i32, i32) {
    %c0_i32 = arith.constant 0 : i32
    %c0_i32_0 = arith.constant 0 : i32
    %c0_i32_1 = arith.constant 0 : i32
    return %c0_i32, %c0_i32_0 : i32, i32
  }
  func.func @transform_5(%arg0: i32) -> (i32, i32) {
    %c0_i32 = arith.constant 0 : i32
    %c0_i32_0 = arith.constant 0 : i32
    %c0_i32_1 = arith.constant 0 : i32
    return %c0_i32, %c0_i32_0 : i32, i32
  }
  func.func @transform_6(%arg0: i32) -> (i32, i32) {
    %c0_i32 = arith.constant 0 : i32
    %c0_i32_0 = arith.constant 0 : i32
    %c0_i32_1 = arith.constant 0 : i32
    return %c0_i32, %c0_i32_0 : i32, i32
  }
  func.func @transform_7(%arg0: i32) -> (i32, i32, i32) {
    %c0_i32 = arith.constant 0 : i32
    %c0_i32_0 = arith.constant 0 : i32
    %c0_i32_1 = arith.constant 0 : i32
    return %arg0, %c0_i32, %c0_i32_0 : i32, i32, i32
  }
}

</mosaic_0001>

<llo_original>
// kernel: tpu_custom_call.1
$region0: #{tpu_custom_call.1}
  #allocation0 [shape = 'u32[]', space=smem, size = 0x4, offset = 0x4, fixed_abs, tag = 'smem constant byte address 0x4 - core index']
  #allocation1 [shape = 'u32[144,128]{1,0:T(1,128)}', space=vmem, size = 0x12000, scoped, tag = 'internal scratch']
  %s0 = inlined_call_operand.hbm [shape: f32[2,8,256], index: 0, kind: input, shape index: {}]
  %s1 = inlined_call_operand.vmem [shape: f32[4,4], index: 1, kind: input, shape index: {}]
  %s2 = inlined_call_operand.vmem [shape: f32[4,1], index: 2, kind: input, shape index: {}]
  %s3 = inlined_call_operand.vmem [shape: f32[4,4], index: 3, kind: input, shape index: {}]
  %s4 = inlined_call_operand.vmem [shape: f32[4,1], index: 4, kind: input, shape index: {}]
  %s5 = inlined_call_operand.vmem [shape: f32[4,4], index: 5, kind: input, shape index: {}]
  %s6 = inlined_call_operand.vmem [shape: f32[4,1], index: 6, kind: input, shape index: {}]
  %s7 = inlined_call_operand.hbm [shape: f32[2,4,256], index: 7, kind: output, shape index: {}]
  %s8 = sld [smem:[#allocation0]]
  $region65: #{tpu_custom_call.1} parent=0
    _
  %s10 = ssub.s32 1, %s8
  %s11 = scalar_select 0, %s10, %s8
  $region1: #{tpu_custom_call.1} parent=0
    #allocation2 [shape = 'u8[16384]{0}', space=vmem, size = 0x4000, scoped, tag = 'input window, operand 0']
    #allocation3 [shape = 's32[2]{0}', space=sflag, size = 0x8, scoped, tag = 'scoped memory for tpu_custom_call.1']
    #allocation4 [shape = 's32[2]{0}', space=sflag, size = 0x8, scoped, tag = 'scoped memory for tpu_custom_call.1']
    #allocation5 [shape = 'u8[8192]{0}', space=vmem, size = 0x2000, scoped, tag = 'output window, operand 0']
    %12 = vsyncpa [#allocation3], 0
    %s13 = scalar_lea.sflag [#allocation3], 1
    %14 = vsyncpa %s13, 0
    %15 = vsyncpa [#allocation4], 0
    %s16 = scalar_lea.sflag [#allocation4], 1
    %17 = vsyncpa %s16, 0
    loop: start=0, step=1, limit=4
    $region2: #{tpu_custom_call.1} parent=1 // loop_pre_header
      _
    $region3: #{tpu_custom_call.1} parent=1 // loop_header
      %s19 = sphi 0, %s23
      %p20 = scmp.ge.s32.totalorder %s19, 4
      %s29 = sphi 0, %s31
      %s32 = sphi 0, %s29
      %s33 = sphi 0, %s32
      %s49 = sphi 0, %s33
      %s53 = sphi 0, %s53
      %s55 = sphi 0, %s53
      %s56 = sphi 0, %s55
      %s70 = sphi 0, %s56
      %s74 = sphi 0, %s74
      %s76 = sphi 0, %s74
      %s77 = sphi 0, %s76
      %s91 = sphi 0, %s77
      %s95 = sphi 0, %s95
      %s97 = sphi 0, %s95
      %s98 = sphi 0, %s97
      %s112 = sphi 0, %s98
      %s116 = sphi 0, %s116
      %s118 = sphi 0, %s116
      %s119 = sphi 0, %s118
      %s133 = sphi 0, %s119
      %s137 = sphi 0, %s137
      %s139 = sphi 0, %s137
      %s140 = sphi 0, %s139
      %s154 = sphi 0, %s140
      %s158 = sphi 0, %s158
      %s160 = sphi 0, %s158
      %s161 = sphi 0, %s160
      %s175 = sphi 0, %s161
      %s181 = sphi 0, %s183
      %s184 = sphi 0, %s181
      %s185 = sphi 0, %s184
      %s201 = sphi 0, %s185
    $region4: #{tpu_custom_call.1} parent=1 // loop_header_branch
      %22 = sbr.rel (%p20) target = $region8
    $region5: #{tpu_custom_call.1} parent=1 // loop_body
      %s24 = ssub.s32 %s19, 1
      %s25 = ssub.s32 %s19, 2
      %s26 = sadd.s32 %s19, 1
      %s27 = ssub.s32 %s19, %s26
      %p28 = scmp.eq.s32.totalorder %s27, 0
      %s30 = sadd.s32 %s29, 1
      %s31 = scalar_select %p28, %s29, %s30
      %p34 = pneg %p28
      %p35 = scmp.eq.s32.totalorder %s19, 1
      %p36 = por %p34, %p35
      %p37 = scmp.ne.s32.totalorder %s29, %s32
      %p38 = scmp.eq.s32.totalorder %s19, 0
      %p39 = por %p37, %p38
      %p40 = scmp.ne.s32.totalorder %s29, %s32
      %p41 = scmp.eq.s32.totalorder %s24, 1
      %p42 = por %p40, %p41
      %p43 = scmp.ne.s32.totalorder %s32, %s33
      %p44 = scmp.eq.s32.totalorder %s24, 0
      %p45 = por %p43, %p44
      %p46 = scmp.ne.s32.totalorder %s32, %s33
      %p47 = scmp.eq.s32.totalorder %s25, 1
      %p48 = por %p46, %p47
      %p50 = scmp.ne.s32.totalorder %s33, %s49
      %p51 = scmp.eq.s32.totalorder %s25, 0
      %p52 = por %p50, %p51
      %s54 = sadd.s32 %s53, 1
      %p57 = scmp.eq.s32.totalorder %s19, 1
      %p58 = scmp.ne.s32.totalorder %s53, %s55
      %p59 = scmp.eq.s32.totalorder %s19, 0
      %p60 = por %p58, %p59
      %p61 = scmp.ne.s32.totalorder %s53, %s55
      %p62 = scmp.eq.s32.totalorder %s24, 1
      %p63 = por %p61, %p62
      %p64 = scmp.ne.s32.totalorder %s55, %s56
      %p65 = scmp.eq.s32.totalorder %s24, 0
      %p66 = por %p64, %p65
      %p67 = scmp.ne.s32.totalorder %s55, %s56
      %p68 = scmp.eq.s32.totalorder %s25, 1
      %p69 = por %p67, %p68
      %p71 = scmp.ne.s32.totalorder %s56, %s70
      %p72 = scmp.eq.s32.totalorder %s25, 0
      %p73 = por %p71, %p72
      %s75 = sadd.s32 %s74, 1
      %p78 = scmp.eq.s32.totalorder %s19, 1
      %p79 = scmp.ne.s32.totalorder %s74, %s76
      %p80 = scmp.eq.s32.totalorder %s19, 0
      %p81 = por %p79, %p80
      %p82 = scmp.ne.s32.totalorder %s74, %s76
      %p83 = scmp.eq.s32.totalorder %s24, 1
      %p84 = por %p82, %p83
      %p85 = scmp.ne.s32.totalorder %s76, %s77
      %p86 = scmp.eq.s32.totalorder %s24, 0
      %p87 = por %p85, %p86
      %p88 = scmp.ne.s32.totalorder %s76, %s77
      %p89 = scmp.eq.s32.totalorder %s25, 1
      %p90 = por %p88, %p89
      %p92 = scmp.ne.s32.totalorder %s77, %s91
      %p93 = scmp.eq.s32.totalorder %s25, 0
      %p94 = por %p92, %p93
      %s96 = sadd.s32 %s95, 1
      %p99 = scmp.eq.s32.totalorder %s19, 1
      %p100 = scmp.ne.s32.totalorder %s95, %s97
      %p101 = scmp.eq.s32.totalorder %s19, 0
      %p102 = por %p100, %p101
      %p103 = scmp.ne.s32.totalorder %s95, %s97
      %p104 = scmp.eq.s32.totalorder %s24, 1
      %p105 = por %p103, %p104
      %p106 = scmp.ne.s32.totalorder %s97, %s98
      %p107 = scmp.eq.s32.totalorder %s24, 0
      %p108 = por %p106, %p107
      %p109 = scmp.ne.s32.totalorder %s97, %s98
      %p110 = scmp.eq.s32.totalorder %s25, 1
      %p111 = por %p109, %p110
      %p113 = scmp.ne.s32.totalorder %s98, %s112
      %p114 = scmp.eq.s32.totalorder %s25, 0
      %p115 = por %p113, %p114
      %s117 = sadd.s32 %s116, 1
      %p120 = scmp.eq.s32.totalorder %s19, 1
      %p121 = scmp.ne.s32.totalorder %s116, %s118
      %p122 = scmp.eq.s32.totalorder %s19, 0
      %p123 = por %p121, %p122
      %p124 = scmp.ne.s32.totalorder %s116, %s118
      %p125 = scmp.eq.s32.totalorder %s24, 1
      %p126 = por %p124, %p125
      %p127 = scmp.ne.s32.totalorder %s118, %s119
      %p128 = scmp.eq.s32.totalorder %s24, 0
      %p129 = por %p127, %p128
      %p130 = scmp.ne.s32.totalorder %s118, %s119
      %p131 = scmp.eq.s32.totalorder %s25, 1
      %p132 = por %p130, %p131
      %p134 = scmp.ne.s32.totalorder %s119, %s133
      %p135 = scmp.eq.s32.totalorder %s25, 0
      %p136 = por %p134, %p135
      %s138 = sadd.s32 %s137, 1
      %p141 = scmp.eq.s32.totalorder %s19, 1
      %p142 = scmp.ne.s32.totalorder %s137, %s139
      %p143 = scmp.eq.s32.totalorder %s19, 0
      %p144 = por %p142, %p143
      %p145 = scmp.ne.s32.totalorder %s137, %s139
      %p146 = scmp.eq.s32.totalorder %s24, 1
      %p147 = por %p145, %p146
      %p148 = scmp.ne.s32.totalorder %s139, %s140
      %p149 = scmp.eq.s32.totalorder %s24, 0
      %p150 = por %p148, %p149
      %p151 = scmp.ne.s32.totalorder %s139, %s140
      %p152 = scmp.eq.s32.totalorder %s25, 1
      %p153 = por %p151, %p152
      %p155 = scmp.ne.s32.totalorder %s140, %s154
      %p156 = scmp.eq.s32.totalorder %s25, 0
      %p157 = por %p155, %p156
      %s159 = sadd.s32 %s158, 1
      %p162 = scmp.eq.s32.totalorder %s19, 1
      %p163 = scmp.ne.s32.totalorder %s158, %s160
      %p164 = scmp.eq.s32.totalorder %s19, 0
      %p165 = por %p163, %p164
      %p166 = scmp.ne.s32.totalorder %s158, %s160
      %p167 = scmp.eq.s32.totalorder %s24, 1
      %p168 = por %p166, %p167
      %p169 = scmp.ne.s32.totalorder %s160, %s161
      %p170 = scmp.eq.s32.totalorder %s24, 0
      %p171 = por %p169, %p170
      %p172 = scmp.ne.s32.totalorder %s160, %s161
      %p173 = scmp.eq.s32.totalorder %s25, 1
      %p174 = por %p172, %p173
      %p176 = scmp.ne.s32.totalorder %s161, %s175
      %p177 = scmp.eq.s32.totalorder %s25, 0
      %p178 = por %p176, %p177
      %s179 = ssub.s32 %s19, %s26
      %p180 = scmp.eq.s32.totalorder %s179, 0
      %s182 = sadd.s32 %s181, 1
      %s183 = scalar_select %p180, %s181, %s182
      %p186 = pneg %p180
      %p187 = scmp.eq.s32.totalorder %s19, 1
      %p188 = por %p186, %p187
      %p189 = scmp.ne.s32.totalorder %s181, %s184
      %p190 = scmp.eq.s32.totalorder %s19, 0
      %p191 = por %p189, %p190
      %p192 = scmp.ne.s32.totalorder %s181, %s184
      %p193 = scmp.eq.s32.totalorder %s24, 1
      %p194 = por %p192, %p193
      %p195 = scmp.ne.s32.totalorder %s184, %s185
      %p196 = scmp.eq.s32.totalorder %s24, 0
      %p197 = por %p195, %p196
      %p198 = scmp.ne.s32.totalorder %s184, %s185
      %p199 = scmp.eq.s32.totalorder %s25, 1
      %p200 = por %p198, %p199
      %p202 = scmp.ne.s32.totalorder %s185, %s201
      %p203 = scmp.eq.s32.totalorder %s25, 0
      %p204 = por %p202, %p203
      %p205 = scmp.le.s32.totalorder 1, %s19
      %p206 = scmp.lt.s32.totalorder %s19, 3
      %p207 = pnand %p205, %p206
      %p208 = pneg %p207
      // Predicated region
      $region9: #{tpu_custom_call.1} parent=5 // pred_check
        _
      $region10: #{tpu_custom_call.1} parent=5 // pred_check_branch
        %210 = sbr.rel (%p207) target = $region12
      $region11: #{tpu_custom_call.1} parent=5 // pred_region
        %s211 = ssub.s32 %s19, 1
        // Predicated region
        $region13: #{tpu_custom_call.1} parent=11 // pred_check
          %p212 = pneg %p66
        $region14: #{tpu_custom_call.1} parent=11 // pred_check_branch
          %214 = sbr.rel (%p212) target = $region16
        $region15: #{tpu_custom_call.1} parent=11 // pred_region
          _
        $region16: #{tpu_custom_call.1} parent=11 // pred_fallthru
          _
        // Predicated region
        $region17: #{tpu_custom_call.1} parent=11 // pred_check
          %p215 = pneg %p87
        $region18: #{tpu_custom_call.1} parent=11 // pred_check_branch
          %217 = sbr.rel (%p215) target = $region20
        $region19: #{tpu_custom_call.1} parent=11 // pred_region
          _
        $region20: #{tpu_custom_call.1} parent=11 // pred_fallthru
          _
        // Predicated region
        $region21: #{tpu_custom_call.1} parent=11 // pred_check
          %p218 = pneg %p108
        $region22: #{tpu_custom_call.1} parent=11 // pred_check_branch
          %220 = sbr.rel (%p218) target = $region24
        $region23: #{tpu_custom_call.1} parent=11 // pred_region
          _
        $region24: #{tpu_custom_call.1} parent=11 // pred_fallthru
          _
        // Predicated region
        $region25: #{tpu_custom_call.1} parent=11 // pred_check
          %p221 = pneg %p129
        $region26: #{tpu_custom_call.1} parent=11 // pred_check_branch
          %223 = sbr.rel (%p221) target = $region28
        $region27: #{tpu_custom_call.1} parent=11 // pred_region
          _
        $region28: #{tpu_custom_call.1} parent=11 // pred_fallthru
          _
        // Predicated region
        $region29: #{tpu_custom_call.1} parent=11 // pred_check
          %p224 = pneg %p150
        $region30: #{tpu_custom_call.1} parent=11 // pred_check_branch
          %226 = sbr.rel (%p224) target = $region32
        $region31: #{tpu_custom_call.1} parent=11 // pred_region
          _
        $region32: #{tpu_custom_call.1} parent=11 // pred_fallthru
          _
        // Predicated region
        $region33: #{tpu_custom_call.1} parent=11 // pred_check
          %p227 = pneg %p171
        $region34: #{tpu_custom_call.1} parent=11 // pred_check_branch
          %229 = sbr.rel (%p227) target = $region36
        $region35: #{tpu_custom_call.1} parent=11 // pred_region
          _
        $region36: #{tpu_custom_call.1} parent=11 // pred_fallthru
          _
      $region12: #{tpu_custom_call.1} parent=5 // pred_fallthru
        _
      %p230 = scmp.lt.s32.totalorder %s19, 2
      // Predicated region
      $region37: #{tpu_custom_call.1} parent=5 // pred_check
        %p231 = pneg %p230
      $region38: #{tpu_custom_call.1} parent=5 // pred_check_branch
        %233 = sbr.rel (%p231) target = $region40
      $region39: #{tpu_custom_call.1} parent=5 // pred_region
        // Predicated region
        $region41: #{tpu_custom_call.1} parent=39 // pred_check
          %p234 = pneg %p39
        $region42: #{tpu_custom_call.1} parent=39 // pred_check_branch
          %236 = sbr.rel (%p234) target = $region44
        $region43: #{tpu_custom_call.1} parent=39 // pred_region
          %s237 = sand.u32 %s29, 1
          %s238 = scalar_lea.sflag [#allocation3], %s237
          %s239 = sand.u32 %s29, 1
          %s240 = smul.addr %s239, 16
          %s241 = scalar_lea.vmem [#allocation2], %s240
          %s243 = ssub.s32 256, 256
          %244 = vsyncadd %s238, %s243
          %s245 = smul.addr %s19, 2
          %s246 = smul.addr %s245, 128
          %s247 = scalar_lea.hbm %s0, %s246
          %s249 = sshll.u32 %s241, 4
          %s250 = int_to_ptr.vmem [resolvable:$true] %s249
          %252 = dma.hbm_to_vmem [thread:$0]  %s247, 256, %s250, %s238
        $region44: #{tpu_custom_call.1} parent=39 // pred_fallthru
          _
      $region40: #{tpu_custom_call.1} parent=5 // pred_fallthru
        _
      %p253 = scmp.le.s32.totalorder 1, %s19
      %p254 = scmp.lt.s32.totalorder %s19, 3
      %p255 = pnand %p253, %p254
      %p256 = pneg %p255
      // Predicated region
      $region45: #{tpu_custom_call.1} parent=5 // pred_check
        _
      $region46: #{tpu_custom_call.1} parent=5 // pred_check_branch
        %258 = sbr.rel (%p255) target = $region48
      $region47: #{tpu_custom_call.1} parent=5 // pred_region
        %s259 = ssub.s32 %s19, 1
        %s260 = sand.u32 %s32, 1
        %s261 = scalar_lea.sflag [#allocation3], %s260
        %s262 = sand.u32 %s32, 1
        %s263 = smul.addr %s262, 16
        %s264 = scalar_lea.vmem [#allocation2], %s263
        // Predicated region
        $region49: #{tpu_custom_call.1} parent=47 // pred_check
          %p265 = pneg %p45
        $region50: #{tpu_custom_call.1} parent=47 // pred_check_branch
          %267 = sbr.rel (%p265) target = $region52
        $region51: #{tpu_custom_call.1} parent=47 // pred_region
          %268 = dma.done %s261, 256
        $region52: #{tpu_custom_call.1} parent=47 // pred_fallthru
          _
        %s269 = sand.u32 %s32, 1
        %s270 = scalar_lea.sflag [#allocation3], %s269
        %s271 = sand.u32 %s32, 1
        %s272 = smul.addr %s271, 16
        %s273 = scalar_lea.vmem [#allocation2], %s272
        %p274 = pneg %p45
        %p275 = pneg %p42
        %p276 = pneg %p66
        %p277 = pneg %p63
        %p278 = pneg %p87
        %p279 = pneg %p84
        %p280 = pneg %p108
        %p281 = pneg %p105
        %p282 = pneg %p129
        %p283 = pneg %p126
        %p284 = pneg %p150
        %p285 = pneg %p147
        %p286 = pneg %p171
        %p287 = pneg %p168
        %p288 = pneg %p197
        %p289 = pneg %p194
        %s290 = sand.u32 %s184, 1
        %s291 = scalar_lea.sflag [#allocation4], %s290
        %s292 = sand.u32 %s184, 1
        %s293 = smul.addr %s292, 8
        %s294 = scalar_lea.vmem [#allocation5], %s293
        %v295 = vld [vmem:[%s1] sm:$0xf]
        %v296 = vld [vmem:[%s3] sm:$0xf]
        %v297 = vld [vmem:[%s5] sm:$0xf]
        %v298 = vld [vmem:[%s2] sm:$0xf]
        %v299 = vld [vmem:[%s4] sm:$0xf]
        %v300 = vld [vmem:[%s6] sm:$0xf]
        %v301 = vld [vmem:[%s264] ss:$8 sm:$0x3]
        %s302 = scalar_lea.vmem %s264, 4 [#allocation2]
        %v303 = vld [vmem:[%s302] ss:$8 sm:$0x3]
        %305 = vset.pattern.permute.xlu0 0
        %306 = vperm.xlu0 %305, %v295
        %v307 = vpop.permute.xlu0 %306
        %v310 = vlaneseq
        %v311 = vshrl.u32 %v310, 7
        %v312 = vsub.s32 0, %v311
        %v313 = vrot.slane %v301, %v312
        %v314 = vlaneseq
        %v315 = vshrl.u32 %v314, 7
        %v316 = vsub.s32 1, %v315
        %v317 = vrot.slane %v301, %v316
        %v320 = vmul.f32 %v307, %v313
        %v321 = vmul.f32 %v307, %v317
        %323 = vset.pattern.permute.xlu0 0
        %324 = vperm.xlu0 %323, %v298
        %v325 = vpop.permute.xlu0 %324
        %v327 = vadd.f32 %v325, %v320
        %v328 = vadd.f32 %v325, %v321
        %330 = vset.pattern.permute.xlu0 0
        %331 = vperm.xlu0 %330, %v296
        %v332 = vpop.permute.xlu0 %331
        %v335 = vlaneseq
        %v336 = vshrl.u32 %v335, 7
        %v337 = vsub.s32 0, %v336
        %v338 = vrot.slane %v303, %v337
        %v339 = vlaneseq
        %v340 = vshrl.u32 %v339, 7
        %v341 = vsub.s32 1, %v340
        %v342 = vrot.slane %v303, %v341
        %v345 = vmul.f32 %v332, %v338
        %v346 = vmul.f32 %v332, %v342
        %348 = vset.pattern.permute.xlu0 0
        %349 = vperm.xlu0 %348, %v299
        %v350 = vpop.permute.xlu0 %349
        %v352 = vadd.f32 %v350, %v345
        %v353 = vadd.f32 %v350, %v346
        %s354 = scalar_lea.vmem %s264, 1 [#allocation2]
        %v355 = vld [vmem:[%s354] ss:$8 sm:$0x3]
        %s356 = scalar_lea.vmem %s264, 5 [#allocation2]
        %v357 = vld [vmem:[%s356] ss:$8 sm:$0x3]
        %358 = vset.pattern.permute.xlu0 1
        %359 = vperm.xlu0 %358, %v295
        %v360 = vpop.permute.xlu0 %359
        %v363 = vlaneseq
        %v364 = vshrl.u32 %v363, 7
        %v365 = vsub.s32 0, %v364
        %v366 = vrot.slane %v355, %v365
        %v367 = vlaneseq
        %v368 = vshrl.u32 %v367, 7
        %v369 = vsub.s32 1, %v368
        %v370 = vrot.slane %v355, %v369
        %v373 = vmul.f32 %v360, %v366
        %v374 = vmul.f32 %v360, %v370
        %v375 = vadd.f32 %v327, %v373
        %v376 = vadd.f32 %v328, %v374
        %377 = vset.pattern.permute.xlu0 1
        %378 = vperm.xlu0 %377, %v296
        %v379 = vpop.permute.xlu0 %378
        %v382 = vlaneseq
        %v383 = vshrl.u32 %v382, 7
        %v384 = vsub.s32 0, %v383
        %v385 = vrot.slane %v357, %v384
        %v386 = vlaneseq
        %v387 = vshrl.u32 %v386, 7
        %v388 = vsub.s32 1, %v387
        %v389 = vrot.slane %v357, %v388
        %v392 = vmul.f32 %v379, %v385
        %v393 = vmul.f32 %v379, %v389
        %v394 = vadd.f32 %v352, %v392
        %v395 = vadd.f32 %v353, %v393
        %s396 = scalar_lea.vmem %s264, 2 [#allocation2]
        %v397 = vld [vmem:[%s396] ss:$8 sm:$0x3]
        %s398 = scalar_lea.vmem %s264, 6 [#allocation2]
        %v399 = vld [vmem:[%s398] ss:$8 sm:$0x3]
        %400 = vset.pattern.permute.xlu0 2
        %401 = vperm.xlu0 %400, %v295
        %v402 = vpop.permute.xlu0 %401
        %v405 = vlaneseq
        %v406 = vshrl.u32 %v405, 7
        %v407 = vsub.s32 0, %v406
        %v408 = vrot.slane %v397, %v407
        %v409 = vlaneseq
        %v410 = vshrl.u32 %v409, 7
        %v411 = vsub.s32 1, %v410
        %v412 = vrot.slane %v397, %v411
        %v415 = vmul.f32 %v402, %v408
        %v416 = vmul.f32 %v402, %v412
        %v417 = vadd.f32 %v375, %v415
        %v418 = vadd.f32 %v376, %v416
        %419 = vset.pattern.permute.xlu0 2
        %420 = vperm.xlu0 %419, %v296
        %v421 = vpop.permute.xlu0 %420
        %v424 = vlaneseq
        %v425 = vshrl.u32 %v424, 7
        %v426 = vsub.s32 0, %v425
        %v427 = vrot.slane %v399, %v426
        %v428 = vlaneseq
        %v429 = vshrl.u32 %v428, 7
        %v430 = vsub.s32 1, %v429
        %v431 = vrot.slane %v399, %v430
        %v434 = vmul.f32 %v421, %v427
        %v435 = vmul.f32 %v421, %v431
        %v436 = vadd.f32 %v394, %v434
        %v437 = vadd.f32 %v395, %v435
        %s438 = scalar_lea.vmem %s264, 3 [#allocation2]
        %v439 = vld [vmem:[%s438] ss:$8 sm:$0x3]
        %s440 = scalar_lea.vmem %s264, 7 [#allocation2]
        %v441 = vld [vmem:[%s440] ss:$8 sm:$0x3]
        %442 = vset.pattern.permute.xlu0 3
        %443 = vperm.xlu0 %442, %v295
        %v444 = vpop.permute.xlu0 %443
        %v447 = vlaneseq
        %v448 = vshrl.u32 %v447, 7
        %v449 = vsub.s32 0, %v448
        %v450 = vrot.slane %v439, %v449
        %v451 = vlaneseq
        %v452 = vshrl.u32 %v451, 7
        %v453 = vsub.s32 1, %v452
        %v454 = vrot.slane %v439, %v453
        %v457 = vmul.f32 %v444, %v450
        %v458 = vmul.f32 %v444, %v454
        %v459 = vadd.f32 %v417, %v457
        %v460 = vadd.f32 %v418, %v458
        %461 = vset.pattern.permute.xlu0 3
        %462 = vperm.xlu0 %461, %v296
        %v463 = vpop.permute.xlu0 %462
        %v466 = vlaneseq
        %v467 = vshrl.u32 %v466, 7
        %v468 = vsub.s32 0, %v467
        %v469 = vrot.slane %v441, %v468
        %v470 = vlaneseq
        %v471 = vshrl.u32 %v470, 7
        %v472 = vsub.s32 1, %v471
        %v473 = vrot.slane %v441, %v472
        %v476 = vmul.f32 %v463, %v469
        %v477 = vmul.f32 %v463, %v473
        %v478 = vadd.f32 %v436, %v476
        %v479 = vadd.f32 %v437, %v477
        %vm480 = vcmask 1043456
        %v481 = vsel %vm480, %v459, -inf
        %v482 = vsel %vm480, %v460, -inf
        %v483 = vmax.f32 %v481, %v482
        %484 = vmax.xlane.f32.xlu0 %v483
        %v485 = vpop.xlane.xlu0 %484
        %v486 = vsub.f32 %v459, %v485
        %v487 = vsub.f32 %v460, %v485
        %v488 = vmul.f32 %v486, 1.442695
        %v489 = vpow.pop %v488
        %v490 = vmul.f32 %v487, 1.442695
        %v491 = vpow.pop %v490
        %v492 = vsel %vm480, %v489, 0.0
        %v493 = vsel %vm480, %v491, 0.0
        %v494 = vadd.f32 %v492, %v493
        %495 = vadd.xlane.f32.xlu0 %v494
        %v496 = vpop.xlane.xlu0 %495
        %v497 = vrcp.pop %v496
        %v498 = vmul.f32 %v489, %v497
        %v499 = vmul.f32 %v491, %v497
        %v500 = vmul.f32 %v498, %v459
        %v501 = vmul.f32 %v499, %v460
        %v502 = vadd.f32 %v500, %v478
        %v503 = vadd.f32 %v501, %v479
        %505 = vset.pattern.permute.xlu0 0
        %506 = vperm.xlu0 %505, %v297
        %v507 = vpop.permute.xlu0 %506
        %v509 = vlaneseq
        %v510 = vshrl.u32 %v509, 7
        %v511 = vsub.s32 0, %v510
        %v512 = vrot.slane %v502, %v511
        %v513 = vlaneseq
        %v514 = vshrl.u32 %v513, 7
        %v515 = vsub.s32 0, %v514
        %v516 = vrot.slane %v503, %v515
        %v517 = vmul.f32 %v507, %v512
        %v518 = vmul.f32 %v507, %v516
        %520 = vset.pattern.permute.xlu0 0
        %521 = vperm.xlu0 %520, %v300
        %v522 = vpop.permute.xlu0 %521
        %v524 = vadd.f32 %v522, %v517
        %v525 = vadd.f32 %v522, %v518
        %526 = vset.pattern.permute.xlu0 1
        %527 = vperm.xlu0 %526, %v297
        %v528 = vpop.permute.xlu0 %527
        %v530 = vlaneseq
        %v531 = vshrl.u32 %v530, 7
        %v532 = vsub.s32 1, %v531
        %v533 = vrot.slane %v502, %v532
        %v534 = vlaneseq
        %v535 = vshrl.u32 %v534, 7
        %v536 = vsub.s32 1, %v535
        %v537 = vrot.slane %v503, %v536
        %v538 = vmul.f32 %v528, %v533
        %v539 = vmul.f32 %v528, %v537
        %v540 = vadd.f32 %v524, %v538
        %v541 = vadd.f32 %v525, %v539
        %542 = vset.pattern.permute.xlu0 2
        %543 = vperm.xlu0 %542, %v297
        %v544 = vpop.permute.xlu0 %543
        %v546 = vlaneseq
        %v547 = vshrl.u32 %v546, 7
        %v548 = vsub.s32 2, %v547
        %v549 = vrot.slane %v502, %v548
        %v550 = vlaneseq
        %v551 = vshrl.u32 %v550, 7
        %v552 = vsub.s32 2, %v551
        %v553 = vrot.slane %v503, %v552
        %v554 = vmul.f32 %v544, %v549
        %v555 = vmul.f32 %v544, %v553
        %v556 = vadd.f32 %v540, %v554
        %v557 = vadd.f32 %v541, %v555
        %558 = vset.pattern.permute.xlu0 3
        %559 = vperm.xlu0 %558, %v297
        %v560 = vpop.permute.xlu0 %559
        %v562 = vlaneseq
        %v563 = vshrl.u32 %v562, 7
        %v564 = vsub.s32 3, %v563
        %v565 = vrot.slane %v502, %v564
        %v566 = vlaneseq
        %v567 = vshrl.u32 %v566, 7
        %v568 = vsub.s32 3, %v567
        %v569 = vrot.slane %v503, %v568
        %v570 = vmul.f32 %v560, %v565
        %v571 = vmul.f32 %v560, %v569
        %v572 = vadd.f32 %v556, %v570
        %v573 = vadd.f32 %v557, %v571
        %v576 = vcombine.low %v572, %v573
        %578 = vst [vmem:[%s294] sm:$0xff] %v576
        %s579 = sand.u32 %s184, 1
        %s580 = scalar_lea.sflag [#allocation4], %s579
        %s581 = sand.u32 %s184, 1
        %s582 = smul.addr %s581, 8
        %s583 = scalar_lea.vmem [#allocation5], %s582
        // Predicated region
        $region53: #{tpu_custom_call.1} parent=47 // pred_check
          %p584 = pneg %p194
        $region54: #{tpu_custom_call.1} parent=47 // pred_check_branch
          %586 = sbr.rel (%p584) target = $region56
        $region55: #{tpu_custom_call.1} parent=47 // pred_region
          %s588 = ssub.s32 128, 128
          %589 = vsyncadd %s580, %s588
          %s590 = smul.addr %s24, 2
          %s591 = smul.addr %s590, 64
          %s592 = scalar_lea.hbm %s7, %s591
          %s594 = sshll.u32 %s583, 4
          %s595 = int_to_ptr.vmem [resolvable:$true] %s594
          %597 = dma.vmem_to_hbm [thread:$0]  %s595, 128, %s592, %s580
        $region56: #{tpu_custom_call.1} parent=47 // pred_fallthru
          _
      $region48: #{tpu_custom_call.1} parent=5 // pred_fallthru
        _
      %p598 = scmp.le.s32.totalorder 2, %s19
      // Predicated region
      $region57: #{tpu_custom_call.1} parent=5 // pred_check
        %p599 = pneg %p598
      $region58: #{tpu_custom_call.1} parent=5 // pred_check_branch
        %601 = sbr.rel (%p599) target = $region60
      $region59: #{tpu_custom_call.1} parent=5 // pred_region
        %s602 = ssub.s32 %s19, 2
        // Predicated region
        $region61: #{tpu_custom_call.1} parent=59 // pred_check
          %p603 = pneg %p200
        $region62: #{tpu_custom_call.1} parent=59 // pred_check_branch
          %605 = sbr.rel (%p603) target = $region64
        $region63: #{tpu_custom_call.1} parent=59 // pred_region
          %s606 = sand.u32 %s185, 1
          %s607 = scalar_lea.sflag [#allocation4], %s606
          %s608 = sand.u32 %s185, 1
          %s609 = smul.addr %s608, 8
          %s610 = scalar_lea.vmem [#allocation5], %s609
          %611 = dma.done %s607, 128
        $region64: #{tpu_custom_call.1} parent=59 // pred_fallthru
          _
      $region60: #{tpu_custom_call.1} parent=5 // pred_fallthru
        _
    $region6: #{tpu_custom_call.1} parent=1 // loop_footer
      %s23 = sadd.s32 1, %s19
    $region7: #{tpu_custom_call.1} parent=1 // loop_footer_branch
      %18 = sbr.rel target = $region3
    $region8: #{tpu_custom_call.1} parent=1 // loop_exit
      _
    %612 = vsyncpa [#allocation3], 1
    %s613 = scalar_lea.sflag [#allocation3], 1
    %614 = vsyncpa %s613, 1
    %615 = vsyncpa [#allocation4], 1
    %s616 = scalar_lea.sflag [#allocation4], 1
    %617 = vsyncpa %s616, 1

</llo_original>
